<compile_context>
chip_gen: v6e
topology: v6e:2x2x1
jax: 0.10.0
libtpu: 0.0.40
codegen_flags: <defaults>
</compile_context>

<pallas_src>
import jax
import jax.numpy as jnp
from jax.experimental import pallas as pl
from jax.experimental.pallas import tpu as pltpu

vocab_size = 50
d_model = 32

_LANE = 128          # lane width: output last dim must be a multiple of this
_SUBLANE = 8         # sublane granularity for the table's vocab dim
_TOKEN_TILE = 256    # tokens per grid step (>=256 keeps per-step overhead small)


def _embed_kernel(ids_ref, table_ref, out_ref):
    # ids_ref:   (TN, 1)        int32   token ids for this grid step
    # table_ref: (V_pad, D_pad) float32 embedding table (padded, VMEM-resident)
    # out_ref:   (TN, D_pad)    float32 gathered embeddings (lane-dense store)
    ids = ids_ref[...]                                          # (TN, 1)
    tn = ids.shape[0]
    v_pad = table_ref.shape[0]
    # one-hot(ids) via lane-wise iota compare (VPU), then MXU matmul with the
    # resident table. ids are pre-clamped to [0, V), so every row hits exactly
    # one table entry.
    iota = jax.lax.broadcasted_iota(jnp.int32, (tn, v_pad), 1)  # (TN, V_pad)
    onehot = (iota == ids).astype(table_ref.dtype)              # (TN, V_pad)
    out_ref[...] = jnp.dot(
        onehot, table_ref[...], preferred_element_type=jnp.float32
    ).astype(out_ref.dtype)


def token_embedding(x, table, *, token_tile=_TOKEN_TILE):
    """x: (B, S) integer token ids; table: (V, D) float32 -> (B, S, D) float32."""
    B, S = x.shape
    V, D = table.shape
    N = B * S

    # Lane-pad the feature dim so the output store is lane-dense; sublane-pad
    # the vocab dim so the table / one-hot tiles are (8,128)-aligned.
    D_pad = ((D + _LANE - 1) // _LANE) * _LANE
    V_pad = ((V + _SUBLANE - 1) // _SUBLANE) * _SUBLANE
    # Pad the token count up to a whole number of tiles.
    tn = token_tile
    N_pad = ((N + tn - 1) // tn) * tn

    # Clamp ids into range (matches JAX gather semantics; avoids the silent
    # all-zero row the one-hot would otherwise produce for bad ids).
    ids = jnp.clip(x.reshape(-1).astype(jnp.int32), 0, V - 1)
    ids = jnp.pad(ids, (0, N_pad - N)).reshape(N_pad, 1)

    table_p = jnp.pad(table, ((0, V_pad - V), (0, D_pad - D)))

    out_flat = pl.pallas_call(
        _embed_kernel,
        out_shape=jax.ShapeDtypeStruct((N_pad, D_pad), table.dtype),
        grid_spec=pltpu.PrefetchScalarGridSpec(
            num_scalar_prefetch=0,
            grid=(N_pad // tn,),
            in_specs=[
                # ids: tiled along the token axis.
                pl.BlockSpec((tn, 1), lambda i: (i, 0)),
                # table: constant index_map -> stays resident in VMEM.
                pl.BlockSpec((V_pad, D_pad), lambda i: (0, 0)),
            ],
            # output: lane-dense (D_pad multiple of 128), tiled along tokens.
            out_specs=pl.BlockSpec((tn, D_pad), lambda i: (i, 0)),
        ),
        compiler_params=pltpu.CompilerParams(
            # Token axis is embarrassingly parallel -> shard across v7x's 2 TCs.
            dimension_semantics=("parallel",)
        ),
    )(ids, table_p)

    return out_flat[:N, :D].reshape(B, S, D)


if __name__ == "__main__":
    key = jax.random.PRNGKey(0)
    k_table, k_ids = jax.random.split(key)

    # Deterministic "parameters": nn.Embedding default init is N(0, 1).
    table = jax.random.normal(k_table, (vocab_size, d_model), dtype=jnp.float32)

    # Small example input: batch=2, seq=8, integer token ids in [0, vocab_size).
    x = jax.random.randint(k_ids, (2, 8), 0, vocab_size, dtype=jnp.int32)

    out = token_embedding(x, table)
    out = jax.block_until_ready(out)

    # Sanity check against plain JAX gather (== PyTorch nn.Embedding forward).
    ref = table[x]
    assert out.shape == (2, 8, d_model)
    assert jnp.allclose(out, ref, atol=1e-5), "mismatch vs reference gather"

    print("KERNEL_OK")
</pallas_src>

<mosaic_0001>
module attributes {stable_mosaic.version = 11 : i64} {
  func.func @_embed_kernel(%arg0: i32, %arg1: memref<256x1xi32, #tpu.memory_space<vmem>>, %arg2: memref<56x128xf32, #tpu.memory_space<vmem>>, %arg3: memref<256x128xf32, #tpu.memory_space<vmem>>) attributes {dimension_semantics = [#tpu.dimension_semantics<parallel>], iteration_bounds = array<i64: 1>, scalar_prefetch = 0 : i64, scratch_operands = 0 : i64, tpu.core_type = #tpu.core_type<tc>, window_params = [{transform_indices = @transform_0, window_bounds = array<i64: 256, 1>}, {pipeline_mode = #tpu.pipeline_mode<synchronous>, transform_indices = @transform_1, window_bounds = array<i64: 56, 128>}, {transform_indices = @transform_2, window_bounds = array<i64: 256, 128>}]} {
    %c0 = arith.constant 0 : index
    %c0_0 = arith.constant 0 : index
    %0 = vector.load %arg1[%c0, %c0_0] : memref<256x1xi32, #tpu.memory_space<vmem>>, vector<256x1xi32>
    %1 = tpu.iota {dimensions = array<i32: 1>} : vector<256x56xi32>
    %2 = vector.broadcast %0 : vector<256x1xi32> to vector<256x56xi32>
    %3 = arith.cmpi eq, %1, %2 : vector<256x56xi32>
    %4 = arith.extui %3 : vector<256x56xi1> to vector<256x56xi32>
    %5 = arith.sitofp %4 : vector<256x56xi32> to vector<256x56xf32>
    %c0_1 = arith.constant 0 : index
    %c0_2 = arith.constant 0 : index
    %6 = vector.load %arg2[%c0_1, %c0_2] : memref<56x128xf32, #tpu.memory_space<vmem>>, vector<56x128xf32>
    %cst = arith.constant dense<0.000000e+00> : vector<256x128xf32>
    %7 = tpu.matmul %5, %6, %cst {dimension_numbers = #tpu.dot_dimension_numbers<[1], [0], [0], [1], [0, 0, 1, 1], [], []>} : vector<256x56xf32>, vector<56x128xf32>, vector<256x128xf32> -> vector<256x128xf32>
    %c0_3 = arith.constant 0 : index
    %c0_4 = arith.constant 0 : index
    %8 = vector.load %arg3[%c0_3, %c0_4] : memref<256x128xf32, #tpu.memory_space<vmem>>, vector<256x128xf32>
    tpu.vector_store %arg3[%c0_3, %c0_4], %7 {strides = array<i32>} : memref<256x128xf32, #tpu.memory_space<vmem>>, vector<256x128xf32>,
    return
  }
  func.func @transform_0(%arg0: i32) -> (i32, i32) {
    %c0_i32 = arith.constant 0 : i32
    %c0_i32_0 = arith.constant 0 : i32
    return %arg0, %c0_i32 : i32, i32
  }
  func.func @transform_1(%arg0: i32) -> (i32, i32) {
    %c0_i32 = arith.constant 0 : i32
    %c0_i32_0 = arith.constant 0 : i32
    %c0_i32_1 = arith.constant 0 : i32
    return %c0_i32, %c0_i32_0 : i32, i32
  }
  func.func @transform_2(%arg0: i32) -> (i32, i32) {
    %c0_i32 = arith.constant 0 : i32
    %c0_i32_0 = arith.constant 0 : i32
    return %arg0, %c0_i32 : i32, i32
  }
}

</mosaic_0001>

<llo_original>
// kernel: tpu_custom_call.1
$region0: #{tpu_custom_call.1}
  #allocation0 [shape = 'u32[]', space=smem, size = 0x4, offset = 0x4, fixed_abs, tag = 'smem constant byte address 0x4 - core index']
  #allocation1 [shape = 'u32[144,128]{1,0:T(1,128)}', space=vmem, size = 0x12000, scoped, tag = 'internal scratch']
  %s0 = inlined_call_operand.vmem [shape: s32[256,1], index: 0, kind: input, shape index: {}]
  %s1 = inlined_call_operand.vmem [shape: f32[56,128], index: 1, kind: input, shape index: {}]
  %s2 = inlined_call_operand.hbm [shape: f32[256,128], index: 2, kind: output, shape index: {}]
  %s3 = sld [smem:[#allocation0]]
  $region18: #{tpu_custom_call.1} parent=0
    _
  %s5 = ssub.s32 1, %s3
  %s6 = scalar_select 0, %s5, %s3
  $region1: #{tpu_custom_call.1} parent=0
    #allocation2 [shape = 'u8[131072]{0}', space=vmem, size = 0x20000, scoped, tag = 'output window, operand 0, single buffered']
    #allocation3 [shape = 's32[1]{0}', space=sflag, size = 0x4, scoped, tag = 'scoped memory for tpu_custom_call.1']
    %7 = vsyncpa [#allocation3], 0
    // Predicated region
    $region2: #{tpu_custom_call.1} parent=1 // pred_check
      _
    $region3: #{tpu_custom_call.1} parent=1 // pred_check_branch
      %9 = sbr.rel (0) target = $region5
    $region4: #{tpu_custom_call.1} parent=1 // pred_region
      _
    $region5: #{tpu_custom_call.1} parent=1 // pred_fallthru
      _
    // Predicated region
    $region6: #{tpu_custom_call.1} parent=1 // pred_check
      _
    $region7: #{tpu_custom_call.1} parent=1 // pred_check_branch
      %11 = sbr.rel (0) target = $region9
    $region8: #{tpu_custom_call.1} parent=1 // pred_region
      _
    $region9: #{tpu_custom_call.1} parent=1 // pred_fallthru
      _
    %v12 = vld [vmem:[%s0] sm:$0xff]
    %v13 = vld [vmem:[%s0 + $0x8] sm:$0xff]
    %v14 = vld [vmem:[%s0 + $0x10] sm:$0xff]
    %v15 = vld [vmem:[%s0 + $0x18] sm:$0xff]
    %v16 = vld [vmem:[%s0 + $0x20] sm:$0xff]
    %v17 = vld [vmem:[%s0 + $0x28] sm:$0xff]
    %v18 = vld [vmem:[%s0 + $0x30] sm:$0xff]
    %v19 = vld [vmem:[%s0 + $0x38] sm:$0xff]
    %v20 = vld [vmem:[%s0 + $0x40] sm:$0xff]
    %v21 = vld [vmem:[%s0 + $0x48] sm:$0xff]
    %v22 = vld [vmem:[%s0 + $0x50] sm:$0xff]
    %v23 = vld [vmem:[%s0 + $0x58] sm:$0xff]
    %v24 = vld [vmem:[%s0 + $0x60] sm:$0xff]
    %v25 = vld [vmem:[%s0 + $0x68] sm:$0xff]
    %v26 = vld [vmem:[%s0 + $0x70] sm:$0xff]
    %v27 = vld [vmem:[%s0 + $0x78] sm:$0xff]
    %v28 = vld [vmem:[%s0 + $0x80] sm:$0xff]
    %v29 = vld [vmem:[%s0 + $0x88] sm:$0xff]
    %v30 = vld [vmem:[%s0 + $0x90] sm:$0xff]
    %v31 = vld [vmem:[%s0 + $0x98] sm:$0xff]
    %v32 = vld [vmem:[%s0 + $0xa0] sm:$0xff]
    %v33 = vld [vmem:[%s0 + $0xa8] sm:$0xff]
    %v34 = vld [vmem:[%s0 + $0xb0] sm:$0xff]
    %v35 = vld [vmem:[%s0 + $0xb8] sm:$0xff]
    %v36 = vld [vmem:[%s0 + $0xc0] sm:$0xff]
    %v37 = vld [vmem:[%s0 + $0xc8] sm:$0xff]
    %v38 = vld [vmem:[%s0 + $0xd0] sm:$0xff]
    %v39 = vld [vmem:[%s0 + $0xd8] sm:$0xff]
    %v40 = vld [vmem:[%s0 + $0xe0] sm:$0xff]
    %v41 = vld [vmem:[%s0 + $0xe8] sm:$0xff]
    %v42 = vld [vmem:[%s0 + $0xf0] sm:$0xff]
    %v43 = vld [vmem:[%s0 + $0xf8] sm:$0xff]
    %v44 = vlaneseq
    %v45 = vand.u32 %v44, 127
    %46 = vset.pattern.permute.xlu0 0
    %47 = vperm.xlu0 %46, %v12
    %v48 = vpop.permute.xlu0 %47
    %49 = vset.pattern.permute.xlu0 0
    %50 = vperm.xlu0 %49, %v13
    %v51 = vpop.permute.xlu0 %50
    %52 = vset.pattern.permute.xlu0 0
    %53 = vperm.xlu0 %52, %v14
    %v54 = vpop.permute.xlu0 %53
    %55 = vset.pattern.permute.xlu0 0
    %56 = vperm.xlu0 %55, %v15
    %v57 = vpop.permute.xlu0 %56
    %58 = vset.pattern.permute.xlu0 0
    %59 = vperm.xlu0 %58, %v16
    %v60 = vpop.permute.xlu0 %59
    %61 = vset.pattern.permute.xlu0 0
    %62 = vperm.xlu0 %61, %v17
    %v63 = vpop.permute.xlu0 %62
    %64 = vset.pattern.permute.xlu0 0
    %65 = vperm.xlu0 %64, %v18
    %v66 = vpop.permute.xlu0 %65
    %67 = vset.pattern.permute.xlu0 0
    %68 = vperm.xlu0 %67, %v19
    %v69 = vpop.permute.xlu0 %68
    %70 = vset.pattern.permute.xlu0 0
    %71 = vperm.xlu0 %70, %v20
    %v72 = vpop.permute.xlu0 %71
    %73 = vset.pattern.permute.xlu0 0
    %74 = vperm.xlu0 %73, %v21
    %v75 = vpop.permute.xlu0 %74
    %76 = vset.pattern.permute.xlu0 0
    %77 = vperm.xlu0 %76, %v22
    %v78 = vpop.permute.xlu0 %77
    %79 = vset.pattern.permute.xlu0 0
    %80 = vperm.xlu0 %79, %v23
    %v81 = vpop.permute.xlu0 %80
    %82 = vset.pattern.permute.xlu0 0
    %83 = vperm.xlu0 %82, %v24
    %v84 = vpop.permute.xlu0 %83
    %85 = vset.pattern.permute.xlu0 0
    %86 = vperm.xlu0 %85, %v25
    %v87 = vpop.permute.xlu0 %86
    %88 = vset.pattern.permute.xlu0 0
    %89 = vperm.xlu0 %88, %v26
    %v90 = vpop.permute.xlu0 %89
    %91 = vset.pattern.permute.xlu0 0
    %92 = vperm.xlu0 %91, %v27
    %v93 = vpop.permute.xlu0 %92
    %94 = vset.pattern.permute.xlu0 0
    %95 = vperm.xlu0 %94, %v28
    %v96 = vpop.permute.xlu0 %95
    %97 = vset.pattern.permute.xlu0 0
    %98 = vperm.xlu0 %97, %v29
    %v99 = vpop.permute.xlu0 %98
    %100 = vset.pattern.permute.xlu0 0
    %101 = vperm.xlu0 %100, %v30
    %v102 = vpop.permute.xlu0 %101
    %103 = vset.pattern.permute.xlu0 0
    %104 = vperm.xlu0 %103, %v31
    %v105 = vpop.permute.xlu0 %104
    %106 = vset.pattern.permute.xlu0 0
    %107 = vperm.xlu0 %106, %v32
    %v108 = vpop.permute.xlu0 %107
    %109 = vset.pattern.permute.xlu0 0
    %110 = vperm.xlu0 %109, %v33
    %v111 = vpop.permute.xlu0 %110
    %112 = vset.pattern.permute.xlu0 0
    %113 = vperm.xlu0 %112, %v34
    %v114 = vpop.permute.xlu0 %113
    %115 = vset.pattern.permute.xlu0 0
    %116 = vperm.xlu0 %115, %v35
    %v117 = vpop.permute.xlu0 %116
    %118 = vset.pattern.permute.xlu0 0
    %119 = vperm.xlu0 %118, %v36
    %v120 = vpop.permute.xlu0 %119
    %121 = vset.pattern.permute.xlu0 0
    %122 = vperm.xlu0 %121, %v37
    %v123 = vpop.permute.xlu0 %122
    %124 = vset.pattern.permute.xlu0 0
    %125 = vperm.xlu0 %124, %v38
    %v126 = vpop.permute.xlu0 %125
    %127 = vset.pattern.permute.xlu0 0
    %128 = vperm.xlu0 %127, %v39
    %v129 = vpop.permute.xlu0 %128
    %130 = vset.pattern.permute.xlu0 0
    %131 = vperm.xlu0 %130, %v40
    %v132 = vpop.permute.xlu0 %131
    %133 = vset.pattern.permute.xlu0 0
    %134 = vperm.xlu0 %133, %v41
    %v135 = vpop.permute.xlu0 %134
    %136 = vset.pattern.permute.xlu0 0
    %137 = vperm.xlu0 %136, %v42
    %v138 = vpop.permute.xlu0 %137
    %139 = vset.pattern.permute.xlu0 0
    %140 = vperm.xlu0 %139, %v43
    %v141 = vpop.permute.xlu0 %140
    %vm142 = vcmp.eq.s32.totalorder %v45, %v48
    %vm143 = vcmp.eq.s32.totalorder %v45, %v51
    %vm144 = vcmp.eq.s32.totalorder %v45, %v54
    %vm145 = vcmp.eq.s32.totalorder %v45, %v57
    %vm146 = vcmp.eq.s32.totalorder %v45, %v60
    %vm147 = vcmp.eq.s32.totalorder %v45, %v63
    %vm148 = vcmp.eq.s32.totalorder %v45, %v66
    %vm149 = vcmp.eq.s32.totalorder %v45, %v69
    %vm150 = vcmp.eq.s32.totalorder %v45, %v72
    %vm151 = vcmp.eq.s32.totalorder %v45, %v75
    %vm152 = vcmp.eq.s32.totalorder %v45, %v78
    %vm153 = vcmp.eq.s32.totalorder %v45, %v81
    %vm154 = vcmp.eq.s32.totalorder %v45, %v84
    %vm155 = vcmp.eq.s32.totalorder %v45, %v87
    %vm156 = vcmp.eq.s32.totalorder %v45, %v90
    %vm157 = vcmp.eq.s32.totalorder %v45, %v93
    %vm158 = vcmp.eq.s32.totalorder %v45, %v96
    %vm159 = vcmp.eq.s32.totalorder %v45, %v99
    %vm160 = vcmp.eq.s32.totalorder %v45, %v102
    %vm161 = vcmp.eq.s32.totalorder %v45, %v105
    %vm162 = vcmp.eq.s32.totalorder %v45, %v108
    %vm163 = vcmp.eq.s32.totalorder %v45, %v111
    %vm164 = vcmp.eq.s32.totalorder %v45, %v114
    %vm165 = vcmp.eq.s32.totalorder %v45, %v117
    %vm166 = vcmp.eq.s32.totalorder %v45, %v120
    %vm167 = vcmp.eq.s32.totalorder %v45, %v123
    %vm168 = vcmp.eq.s32.totalorder %v45, %v126
    %vm169 = vcmp.eq.s32.totalorder %v45, %v129
    %vm170 = vcmp.eq.s32.totalorder %v45, %v132
    %vm171 = vcmp.eq.s32.totalorder %v45, %v135
    %vm172 = vcmp.eq.s32.totalorder %v45, %v138
    %vm173 = vcmp.eq.s32.totalorder %v45, %v141
    %v174 = vsel %vm142, 1, 0
    %v175 = vsel %vm143, 1, 0
    %v176 = vsel %vm144, 1, 0
    %v177 = vsel %vm145, 1, 0
    %v178 = vsel %vm146, 1, 0
    %v179 = vsel %vm147, 1, 0
    %v180 = vsel %vm148, 1, 0
    %v181 = vsel %vm149, 1, 0
    %v182 = vsel %vm150, 1, 0
    %v183 = vsel %vm151, 1, 0
    %v184 = vsel %vm152, 1, 0
    %v185 = vsel %vm153, 1, 0
    %v186 = vsel %vm154, 1, 0
    %v187 = vsel %vm155, 1, 0
    %v188 = vsel %vm156, 1, 0
    %v189 = vsel %vm157, 1, 0
    %v190 = vsel %vm158, 1, 0
    %v191 = vsel %vm159, 1, 0
    %v192 = vsel %vm160, 1, 0
    %v193 = vsel %vm161, 1, 0
    %v194 = vsel %vm162, 1, 0
    %v195 = vsel %vm163, 1, 0
    %v196 = vsel %vm164, 1, 0
    %v197 = vsel %vm165, 1, 0
    %v198 = vsel %vm166, 1, 0
    %v199 = vsel %vm167, 1, 0
    %v200 = vsel %vm168, 1, 0
    %v201 = vsel %vm169, 1, 0
    %v202 = vsel %vm170, 1, 0
    %v203 = vsel %vm171, 1, 0
    %v204 = vsel %vm172, 1, 0
    %v205 = vsel %vm173, 1, 0
    %v206 = vcvt.s32.f32 %v174
    %v207 = vcvt.s32.f32 %v175
    %v208 = vcvt.s32.f32 %v176
    %v209 = vcvt.s32.f32 %v177
    %v210 = vcvt.s32.f32 %v178
    %v211 = vcvt.s32.f32 %v179
    %v212 = vcvt.s32.f32 %v180
    %v213 = vcvt.s32.f32 %v181
    %v214 = vcvt.s32.f32 %v182
    %v215 = vcvt.s32.f32 %v183
    %v216 = vcvt.s32.f32 %v184
    %v217 = vcvt.s32.f32 %v185
    %v218 = vcvt.s32.f32 %v186
    %v219 = vcvt.s32.f32 %v187
    %v220 = vcvt.s32.f32 %v188
    %v221 = vcvt.s32.f32 %v189
    %v222 = vcvt.s32.f32 %v190
    %v223 = vcvt.s32.f32 %v191
    %v224 = vcvt.s32.f32 %v192
    %v225 = vcvt.s32.f32 %v193
    %v226 = vcvt.s32.f32 %v194
    %v227 = vcvt.s32.f32 %v195
    %v228 = vcvt.s32.f32 %v196
    %v229 = vcvt.s32.f32 %v197
    %v230 = vcvt.s32.f32 %v198
    %v231 = vcvt.s32.f32 %v199
    %v232 = vcvt.s32.f32 %v200
    %v233 = vcvt.s32.f32 %v201
    %v234 = vcvt.s32.f32 %v202
    %v235 = vcvt.s32.f32 %v203
    %v236 = vcvt.s32.f32 %v204
    %v237 = vcvt.s32.f32 %v205
    %v238 = vld [vmem:[%s1] sm:$0xff]
    %v239 = vld [vmem:[%s1 + $0x8] sm:$0xff]
    %v240 = vld [vmem:[%s1 + $0x10] sm:$0xff]
    %v241 = vld [vmem:[%s1 + $0x18] sm:$0xff]
    %v242 = vld [vmem:[%s1 + $0x20] sm:$0xff]
    %v243 = vld [vmem:[%s1 + $0x28] sm:$0xff]
    %v244 = vld [vmem:[%s1 + $0x30] sm:$0xff]
    %vm245 = vcmask 457728
    %v247 = vsel %vm245, %v206, 0
    %v250 = vsel %vm245, %v207, 0
    %v253 = vsel %vm245, %v208, 0
    %v256 = vsel %vm245, %v209, 0
    %v259 = vsel %vm245, %v210, 0
    %v262 = vsel %vm245, %v211, 0
    %v265 = vsel %vm245, %v212, 0
    %v268 = vsel %vm245, %v213, 0
    %v271 = vsel %vm245, %v214, 0
    %v274 = vsel %vm245, %v215, 0
    %v277 = vsel %vm245, %v216, 0
    %v280 = vsel %vm245, %v217, 0
    %v283 = vsel %vm245, %v218, 0
    %v286 = vsel %vm245, %v219, 0
    %v289 = vsel %vm245, %v220, 0
    %v292 = vsel %vm245, %v221, 0
    %v295 = vsel %vm245, %v222, 0
    %v298 = vsel %vm245, %v223, 0
    %v301 = vsel %vm245, %v224, 0
    %v304 = vsel %vm245, %v225, 0
    %v307 = vsel %vm245, %v226, 0
    %v310 = vsel %vm245, %v227, 0
    %v313 = vsel %vm245, %v228, 0
    %v316 = vsel %vm245, %v229, 0
    %v319 = vsel %vm245, %v230, 0
    %v322 = vsel %vm245, %v231, 0
    %v325 = vsel %vm245, %v232, 0
    %v328 = vsel %vm245, %v233, 0
    %v331 = vsel %vm245, %v234, 0
    %v334 = vsel %vm245, %v235, 0
    %v337 = vsel %vm245, %v236, 0
    %v340 = vsel %vm245, %v237, 0
    %342 = vmatprep.subr.mxu0 0.0
    %343 = vmatpush1.msra.mxu0 0.0
    %344 = vmatprep.subr.mxu0 0.0
    %345 = vmatpush1.msra.mxu0 0.0
    %346 = vmatprep.subr.mxu0 0.0
    %347 = vmatpush1.msra.mxu0 0.0
    %348 = vmatprep.subr.mxu0 0.0
    %349 = vmatpush1.msra.mxu0 0.0
    %350 = vmatprep.subr.mxu0 0.0
    %351 = vmatpush1.msra.mxu0 0.0
    %352 = vmatprep.subr.mxu0 0.0
    %353 = vmatpush1.msra.mxu0 0.0
    %354 = vmatprep.subr.mxu0 0.0
    %355 = vmatpush1.msra.mxu0 0.0
    %356 = vmatprep.subr.mxu0 0.0
    %357 = vmatpush1.msra.mxu0 0.0
    %358 = vmatprep.subr.mxu0 0.0
    %359 = vmatpush1.msra.mxu0 0.0
    %360 = vmatprep.subr.mxu0 0.0
    %361 = vmatpush1.msra.mxu0 %v244
    %362 = vmatprep.subr.mxu0 0.0
    %363 = vmatpush1.msra.mxu0 %v243
    %364 = vmatprep.subr.mxu0 0.0
    %365 = vmatpush1.msra.mxu0 %v242
    %366 = vmatprep.subr.mxu0 0.0
    %367 = vmatpush1.msra.mxu0 %v241
    %368 = vmatprep.subr.mxu0 0.0
    %369 = vmatpush1.msra.mxu0 %v240
    %370 = vmatprep.subr.mxu0 0.0
    %371 = vmatpush1.msra.mxu0 %v239
    %372 = vmatprep.subr.mxu0 0.0
    %373 = vmatpush1.msra.mxu0 %v238
    %374 = vmatprep.subr.mxu0 0.0
    %375 = vmatpush2.msra.mxu0 0.0
    %376 = vmatprep.subr.mxu0 0.0
    %377 = vmatpush2.msra.mxu0 0.0
    %378 = vmatprep.subr.mxu0 0.0
    %379 = vmatpush2.msra.mxu0 0.0
    %380 = vmatprep.subr.mxu0 0.0
    %381 = vmatpush2.msra.mxu0 0.0
    %382 = vmatprep.subr.mxu0 0.0
    %383 = vmatpush2.msra.mxu0 0.0
    %384 = vmatprep.subr.mxu0 0.0
    %385 = vmatpush2.msra.mxu0 0.0
    %386 = vmatprep.subr.mxu0 0.0
    %387 = vmatpush2.msra.mxu0 0.0
    %388 = vmatprep.subr.mxu0 0.0
    %389 = vmatpush2.msra.mxu0 0.0
    %390 = vmatprep.subr.mxu0 0.0
    %391 = vmatpush2.msra.mxu0 0.0
    %392 = vmatprep.subr.mxu0 0.0
    %393 = vmatpush2.msra.mxu0 0.0
    %394 = vmatprep.subr.mxu0 0.0
    %395 = vmatpush2.msra.mxu0 0.0
    %396 = vmatprep.subr.mxu0 0.0
    %397 = vmatpush2.msra.mxu0 0.0
    %398 = vmatprep.subr.mxu0 0.0
    %399 = vmatpush2.msra.mxu0 0.0
    %400 = vmatprep.subr.mxu0 0.0
    %401 = vmatpush2.msra.mxu0 0.0
    %402 = vmatprep.subr.mxu0 0.0
    %403 = vmatpush2.msra.mxu0 0.0
    %404 = vmatprep.subr.mxu0 0.0
    %405 = vmatpush2.msra.mxu0 0.0
    %406 = vmatprep.mubr.f32.mxu0 0.0
    %407 = vmatmul.mubr.f32.gmra.mxu0 %v247
    %v408 = vpop.f32.mrf.mxu0
    %v409 = vadd.f32 0.0, %v408
    %v410 = vpop.f32.mrf.mxu0
    %411 = vmatprep.mubr.f32.mxu0 0.0
    %412 = vmatmul.mubr.f32.gmra.mxu0 %v250
    %v413 = vpop.f32.mrf.mxu0
    %v414 = vadd.f32 0.0, %v413
    %v415 = vpop.f32.mrf.mxu0
    %416 = vmatprep.mubr.f32.mxu0 0.0
    %417 = vmatmul.mubr.f32.gmra.mxu0 %v253
    %v418 = vpop.f32.mrf.mxu0
    %v419 = vadd.f32 0.0, %v418
    %v420 = vpop.f32.mrf.mxu0
    %421 = vmatprep.mubr.f32.mxu0 0.0
    %422 = vmatmul.mubr.f32.gmra.mxu0 %v256
    %v423 = vpop.f32.mrf.mxu0
    %v424 = vadd.f32 0.0, %v423
    %v425 = vpop.f32.mrf.mxu0
    %426 = vmatprep.mubr.f32.mxu0 0.0
    %427 = vmatmul.mubr.f32.gmra.mxu0 %v259
    %v428 = vpop.f32.mrf.mxu0
    %v429 = vadd.f32 0.0, %v428
    %v430 = vpop.f32.mrf.mxu0
    %431 = vmatprep.mubr.f32.mxu0 0.0
    %432 = vmatmul.mubr.f32.gmra.mxu0 %v262
    %v433 = vpop.f32.mrf.mxu0
    %v434 = vadd.f32 0.0, %v433
    %v435 = vpop.f32.mrf.mxu0
    %436 = vmatprep.mubr.f32.mxu0 0.0
    %437 = vmatmul.mubr.f32.gmra.mxu0 %v265
    %v438 = vpop.f32.mrf.mxu0
    %v439 = vadd.f32 0.0, %v438
    %v440 = vpop.f32.mrf.mxu0
    %441 = vmatprep.mubr.f32.mxu0 0.0
    %442 = vmatmul.mubr.f32.gmra.mxu0 %v268
    %v443 = vpop.f32.mrf.mxu0
    %v444 = vadd.f32 0.0, %v443
    %v445 = vpop.f32.mrf.mxu0
    %446 = vmatprep.mubr.f32.mxu0 0.0
    %447 = vmatmul.mubr.f32.gmra.mxu0 %v271
    %v448 = vpop.f32.mrf.mxu0
    %v449 = vadd.f32 0.0, %v448
    %v450 = vpop.f32.mrf.mxu0
    %451 = vmatprep.mubr.f32.mxu0 0.0
    %452 = vmatmul.mubr.f32.gmra.mxu0 %v274
    %v453 = vpop.f32.mrf.mxu0
    %v454 = vadd.f32 0.0, %v453
    %v455 = vpop.f32.mrf.mxu0
    %456 = vmatprep.mubr.f32.mxu0 0.0
    %457 = vmatmul.mubr.f32.gmra.mxu0 %v277
    %v458 = vpop.f32.mrf.mxu0
    %v459 = vadd.f32 0.0, %v458
    %v460 = vpop.f32.mrf.mxu0
    %461 = vmatprep.mubr.f32.mxu0 0.0
    %462 = vmatmul.mubr.f32.gmra.mxu0 %v280
    %v463 = vpop.f32.mrf.mxu0
    %v464 = vadd.f32 0.0, %v463
    %v465 = vpop.f32.mrf.mxu0
    %466 = vmatprep.mubr.f32.mxu0 0.0
    %467 = vmatmul.mubr.f32.gmra.mxu0 %v283
    %v468 = vpop.f32.mrf.mxu0
    %v469 = vadd.f32 0.0, %v468
    %v470 = vpop.f32.mrf.mxu0
    %471 = vmatprep.mubr.f32.mxu0 0.0
    %472 = vmatmul.mubr.f32.gmra.mxu0 %v286
    %v473 = vpop.f32.mrf.mxu0
    %v474 = vadd.f32 0.0, %v473
    %v475 = vpop.f32.mrf.mxu0
    %476 = vmatprep.mubr.f32.mxu0 0.0
    %477 = vmatmul.mubr.f32.gmra.mxu0 %v289
    %v478 = vpop.f32.mrf.mxu0
    %v479 = vadd.f32 0.0, %v478
    %v480 = vpop.f32.mrf.mxu0
    %481 = vmatprep.mubr.f32.mxu0 0.0
    %482 = vmatmul.mubr.f32.gmra.mxu0 %v292
    %v483 = vpop.f32.mrf.mxu0
    %v484 = vadd.f32 0.0, %v483
    %v485 = vpop.f32.mrf.mxu0
    %486 = vmatprep.mubr.f32.mxu0 0.0
    %487 = vmatmul.mubr.f32.gmra.mxu0 %v295
    %v488 = vpop.f32.mrf.mxu0
    %v489 = vadd.f32 0.0, %v488
    %v490 = vpop.f32.mrf.mxu0
    %491 = vmatprep.mubr.f32.mxu0 0.0
    %492 = vmatmul.mubr.f32.gmra.mxu0 %v298
    %v493 = vpop.f32.mrf.mxu0
    %v494 = vadd.f32 0.0, %v493
    %v495 = vpop.f32.mrf.mxu0
    %496 = vmatprep.mubr.f32.mxu0 0.0
    %497 = vmatmul.mubr.f32.gmra.mxu0 %v301
    %v498 = vpop.f32.mrf.mxu0
    %v499 = vadd.f32 0.0, %v498
    %v500 = vpop.f32.mrf.mxu0
    %501 = vmatprep.mubr.f32.mxu0 0.0
    %502 = vmatmul.mubr.f32.gmra.mxu0 %v304
    %v503 = vpop.f32.mrf.mxu0
    %v504 = vadd.f32 0.0, %v503
    %v505 = vpop.f32.mrf.mxu0
    %506 = vmatprep.mubr.f32.mxu0 0.0
    %507 = vmatmul.mubr.f32.gmra.mxu0 %v307
    %v508 = vpop.f32.mrf.mxu0
    %v509 = vadd.f32 0.0, %v508
    %v510 = vpop.f32.mrf.mxu0
    %511 = vmatprep.mubr.f32.mxu0 0.0
    %512 = vmatmul.mubr.f32.gmra.mxu0 %v310
    %v513 = vpop.f32.mrf.mxu0
    %v514 = vadd.f32 0.0, %v513
    %v515 = vpop.f32.mrf.mxu0
    %516 = vmatprep.mubr.f32.mxu0 0.0
    %517 = vmatmul.mubr.f32.gmra.mxu0 %v313
    %v518 = vpop.f32.mrf.mxu0
    %v519 = vadd.f32 0.0, %v518
    %v520 = vpop.f32.mrf.mxu0
    %521 = vmatprep.mubr.f32.mxu0 0.0
    %522 = vmatmul.mubr.f32.gmra.mxu0 %v316
    %v523 = vpop.f32.mrf.mxu0
    %v524 = vadd.f32 0.0, %v523
    %v525 = vpop.f32.mrf.mxu0
    %526 = vmatprep.mubr.f32.mxu0 0.0
    %527 = vmatmul.mubr.f32.gmra.mxu0 %v319
    %v528 = vpop.f32.mrf.mxu0
    %v529 = vadd.f32 0.0, %v528
    %v530 = vpop.f32.mrf.mxu0
    %531 = vmatprep.mubr.f32.mxu0 0.0
    %532 = vmatmul.mubr.f32.gmra.mxu0 %v322
    %v533 = vpop.f32.mrf.mxu0
    %v534 = vadd.f32 0.0, %v533
    %v535 = vpop.f32.mrf.mxu0
    %536 = vmatprep.mubr.f32.mxu0 0.0
    %537 = vmatmul.mubr.f32.gmra.mxu0 %v325
    %v538 = vpop.f32.mrf.mxu0
    %v539 = vadd.f32 0.0, %v538
    %v540 = vpop.f32.mrf.mxu0
    %541 = vmatprep.mubr.f32.mxu0 0.0
    %542 = vmatmul.mubr.f32.gmra.mxu0 %v328
    %v543 = vpop.f32.mrf.mxu0
    %v544 = vadd.f32 0.0, %v543
    %v545 = vpop.f32.mrf.mxu0
    %546 = vmatprep.mubr.f32.mxu0 0.0
    %547 = vmatmul.mubr.f32.gmra.mxu0 %v331
    %v548 = vpop.f32.mrf.mxu0
    %v549 = vadd.f32 0.0, %v548
    %v550 = vpop.f32.mrf.mxu0
    %551 = vmatprep.mubr.f32.mxu0 0.0
    %552 = vmatmul.mubr.f32.gmra.mxu0 %v334
    %v553 = vpop.f32.mrf.mxu0
    %v554 = vadd.f32 0.0, %v553
    %v555 = vpop.f32.mrf.mxu0
    %556 = vmatprep.mubr.f32.mxu0 0.0
    %557 = vmatmul.mubr.f32.gmra.mxu0 %v337
    %v558 = vpop.f32.mrf.mxu0
    %v559 = vadd.f32 0.0, %v558
    %v560 = vpop.f32.mrf.mxu0
    %561 = vmatprep.mubr.f32.mxu0 0.0
    %562 = vmatmul.mubr.f32.gmra.mxu0 %v340
    %v563 = vpop.f32.mrf.mxu0
    %v564 = vadd.f32 0.0, %v563
    %v565 = vpop.f32.mrf.mxu0
    %566 = vdwg.mxu0
    %567 = vst [vmem:[#allocation2] sm:$0xff] %v409
    %568 = vst [vmem:[#allocation2 + $0x8] sm:$0xff] %v414
    %569 = vst [vmem:[#allocation2 + $0x10] sm:$0xff] %v419
    %570 = vst [vmem:[#allocation2 + $0x18] sm:$0xff] %v424
    %571 = vst [vmem:[#allocation2 + $0x20] sm:$0xff] %v429
    %572 = vst [vmem:[#allocation2 + $0x28] sm:$0xff] %v434
    %573 = vst [vmem:[#allocation2 + $0x30] sm:$0xff] %v439
    %574 = vst [vmem:[#allocation2 + $0x38] sm:$0xff] %v444
    %575 = vst [vmem:[#allocation2 + $0x40] sm:$0xff] %v449
    %576 = vst [vmem:[#allocation2 + $0x48] sm:$0xff] %v454
    %577 = vst [vmem:[#allocation2 + $0x50] sm:$0xff] %v459
    %578 = vst [vmem:[#allocation2 + $0x58] sm:$0xff] %v464
    %579 = vst [vmem:[#allocation2 + $0x60] sm:$0xff] %v469
    %580 = vst [vmem:[#allocation2 + $0x68] sm:$0xff] %v474
    %581 = vst [vmem:[#allocation2 + $0x70] sm:$0xff] %v479
    %582 = vst [vmem:[#allocation2 + $0x78] sm:$0xff] %v484
    %583 = vst [vmem:[#allocation2 + $0x80] sm:$0xff] %v489
    %584 = vst [vmem:[#allocation2 + $0x88] sm:$0xff] %v494
    %585 = vst [vmem:[#allocation2 + $0x90] sm:$0xff] %v499
    %586 = vst [vmem:[#allocation2 + $0x98] sm:$0xff] %v504
    %587 = vst [vmem:[#allocation2 + $0xa0] sm:$0xff] %v509
    %588 = vst [vmem:[#allocation2 + $0xa8] sm:$0xff] %v514
    %589 = vst [vmem:[#allocation2 + $0xb0] sm:$0xff] %v519
    %590 = vst [vmem:[#allocation2 + $0xb8] sm:$0xff] %v524
    %591 = vst [vmem:[#allocation2 + $0xc0] sm:$0xff] %v529
    %592 = vst [vmem:[#allocation2 + $0xc8] sm:$0xff] %v534
    %593 = vst [vmem:[#allocation2 + $0xd0] sm:$0xff] %v539
    %594 = vst [vmem:[#allocation2 + $0xd8] sm:$0xff] %v544
    %595 = vst [vmem:[#allocation2 + $0xe0] sm:$0xff] %v549
    %596 = vst [vmem:[#allocation2 + $0xe8] sm:$0xff] %v554
    %597 = vst [vmem:[#allocation2 + $0xf0] sm:$0xff] %v559
    %598 = vst [vmem:[#allocation2 + $0xf8] sm:$0xff] %v564
    // Predicated region
    $region10: #{tpu_custom_call.1} parent=1 // pred_check
      _
    $region11: #{tpu_custom_call.1} parent=1 // pred_check_branch
      %600 = sbr.rel (0) target = $region13
    $region12: #{tpu_custom_call.1} parent=1 // pred_region
      %s602 = ssub.s32 4096, 4096
      %603 = vsyncadd [#allocation3], %s602
      %s604 = sshll.u32 [#allocation2], 4
      %s605 = int_to_ptr.vmem [resolvable:$true] %s604
      %610 = dma.vmem_to_hbm [thread:$0]  %s605, 4096, %s2, [#allocation3], 128, 128, 8
    $region13: #{tpu_custom_call.1} parent=1 // pred_fallthru
      _
    // Predicated region
    $region14: #{tpu_custom_call.1} parent=1 // pred_check
      _
    $region15: #{tpu_custom_call.1} parent=1 // pred_check_branch
      %612 = sbr.rel (0) target = $region17
    $region16: #{tpu_custom_call.1} parent=1 // pred_region
      %613 = dma.done [#allocation3], 4096
    $region17: #{tpu_custom_call.1} parent=1 // pred_fallthru
      _
    %614 = vsyncpa [#allocation3], 1

</llo_original>
